<compile_context>
chip_gen: v5e
topology: v5e:2x2
jax: 0.10.0
libtpu: 0.0.40
codegen_flags: <defaults>
</compile_context>

<pallas_src>
import jax
import jax.numpy as jnp
from jax import lax
from jax.experimental import pallas as pl
from jax.experimental.pallas import tpu as pltpu

LN_EPS = 1e-5  # nn.LayerNorm default


def _make_kernel(TS, D, CHUNK, NCHUNK, G, DEPTH=2):
    """Build the kernel with compile-time tile constants closed over."""

    def kernel(ids_ref,      # (B, S) int32   SMEM (scalar prefetch) - drives row DMAs
               seg_ref,      # (1, TS, 1) int32 VMEM (sublane-oriented)
               tok_hbm,      # (V, D)  HBM (pl.ANY) - never fully resident
               pos_ref,      # (TS, D) VMEM   - only this tile's positional rows
               segtab_ref,   # (G, D)  VMEM   - tiny
               gamma_ref,    # (1, D)  VMEM
               beta_ref,     # (1, D)  VMEM
               out_ref,      # (1, TS, D) f32
               tok_buf,      # scratch VMEM (TS, D) in table dtype
               sems):        # scratch DMA semaphores (NCHUNK,)
        st = pl.program_id(0)          # sequence-tile index (slow axis)
        b = pl.program_id(1)           # batch index (fast axis)
        base = st * TS

        def start_chunk(ci):           # ci is a static Python int
            def body(r, carry):
                row = ci * CHUNK + r
                tok_id = ids_ref[b, base + row]
                # NOTE: out-of-range ids trip the DMA bounds check (PyTorch
                # nn.Embedding would also error on them).
                pltpu.make_async_copy(tok_hbm.at[pl.ds(tok_id, 1)],
                                      tok_buf.at[pl.ds(row, 1)],
                                      sems.at[ci]).start()
                return carry
            lax.fori_loop(0, CHUNK, body, 0, unroll=8)

        # Prime the gather pipeline: DEPTH chunks of row DMAs in flight.
        for ci in range(min(DEPTH, NCHUNK)):
            start_chunk(ci)

        # Hoisted, loop-invariant VPU operands (JAX does not CSE broadcasts).
        gamma = gamma_ref[0, :][None, :]
        beta = beta_ref[0, :][None, :]
        if G == 2:
            seg0 = segtab_ref[0, :][None, :].astype(jnp.float32)
            segd = (segtab_ref[1, :] - segtab_ref[0, :])[None, :].astype(jnp.float32)
        else:
            seg_rows = [segtab_ref[g, :][None, :].astype(jnp.float32) for g in range(G)]

        for ci in range(NCHUNK):
            # Keep DEPTH chunks of DMAs outstanding ahead of the consumer.
            if ci + DEPTH < NCHUNK:
                start_chunk(ci + DEPTH)

            rows = pl.ds(ci * CHUNK, CHUNK)

            # Aggregate wait: the CHUNK row-copies all signalled sems[ci]; one
            # wait sized (CHUNK, D) drains it (wait keys off sem + byte count,
            # not the src address of the descriptor).
            pltpu.make_async_copy(tok_hbm.at[pl.ds(0, CHUNK)],
                                  tok_buf.at[rows],
                                  sems.at[ci]).wait()

            tok = tok_buf[rows, :].astype(jnp.float32)        # (CHUNK, D)
            pos = pos_ref[rows, :].astype(jnp.float32)        # (CHUNK, D)
            seg_id = seg_ref[0, rows, :]                      # (CHUNK, 1) int32

            if G == 2:
                w = (seg_id == 1).astype(jnp.float32)         # (CHUNK, 1)
                seg_emb = seg0 + w * segd
            else:
                seg_emb = jnp.zeros((CHUNK, D), jnp.float32)
                for g in range(G):
                    seg_emb = seg_emb + (seg_id == g).astype(jnp.float32) * seg_rows[g]

            emb = tok + pos + seg_emb

            # LayerNorm over d_model (lane reduce -> XLU, rsqrt -> EUP).
            mean = jnp.mean(emb, axis=-1, keepdims=True)
            centered = emb - mean
            var = jnp.mean(centered * centered, axis=-1, keepdims=True)
            normed = centered * lax.rsqrt(var + LN_EPS)

            # Single full-D row store (unmasked / lane-dense once D >= 128).
            out_ref[0, rows, :] = normed * gamma + beta

    return kernel


def bert_embedding(x, seg, tok_table, pos_table, seg_table, gamma, beta, *, ts=None):
    B, S = x.shape
    V, D = tok_table.shape
    L = pos_table.shape[0]
    G = seg_table.shape[0]
    assert S <= L, "sequence length exceeds maxlen of positional table"

    # Row tile per grid step: real default (128-512) to amortize per-step
    # overhead; falls back to smaller divisors (incl. S) for toy shapes.
    if ts is None:
        ts = S
        for cand in (512, 256, 128, 64, 32, 16, 8):
            if S % cand == 0:
                ts = cand
                break
    TS = ts
    assert S % TS == 0, "TS must divide S"
    assert TS % 8 == 0, "TS must be a multiple of 8 (f32 sublane)"

    # Gather chunk size (rows per aggregate wait) and pipeline depth.
    CHUNK = next(c for c in (64, 32, 16, 8) if c <= TS and TS % c == 0)
    NCHUNK = TS // CHUNK
    assert V >= CHUNK, "vocab smaller than gather chunk"

    x32 = x.astype(jnp.int32)
    seg3 = seg.astype(jnp.int32).reshape(B, S, 1)   # sublane-oriented seg ids
    gamma2 = gamma.reshape(1, D)
    beta2 = beta.reshape(1, D)

    kernel = _make_kernel(TS, D, CHUNK, NCHUNK, G)

    # VMEM budget: tok_buf + double-buffered pos/out tiles (+ small tables).
    # Only override the scoped limit when the default (32 MiB) is too tight;
    # cap below v7x's 64 MiB physical VMEM.
    vmem_est = 4 * TS * D * 5 + 8 * TS + (2 << 20)
    cp_kwargs = dict(dimension_semantics=("parallel", "parallel"))
    if vmem_est > (24 << 20):
        cp_kwargs["vmem_limit_bytes"] = int(min(vmem_est * 2, 60 << 20))

    # TODO(synk): on v5e/v6e with B*S >> V, a bf16 token table kept fully
    # VMEM-resident (constant-index full-block BlockSpec) beats per-row DMAs;
    # not done here because it does not fit v7x's 64 MiB VMEM.

    grid = (S // TS, B)   # batch varies fastest -> pos tile not re-DMA'd per batch
    return pl.pallas_call(
        kernel,
        out_shape=jax.ShapeDtypeStruct((B, S, D), jnp.float32),
        grid_spec=pltpu.PrefetchScalarGridSpec(
            num_scalar_prefetch=1,          # token ids -> SMEM, drive the row DMAs
            grid=grid,
            in_specs=[
                pl.BlockSpec((1, TS, 1), lambda st, b, ids: (b, st, 0)),   # seg ids
                pl.BlockSpec(memory_space=pl.ANY),                          # tok table (HBM)
                pl.BlockSpec((TS, D), lambda st, b, ids: (st, 0)),          # pos rows of tile
                pl.BlockSpec((G, D), lambda st, b, ids: (0, 0)),            # seg table (tiny)
                pl.BlockSpec((1, D), lambda st, b, ids: (0, 0)),            # gamma
                pl.BlockSpec((1, D), lambda st, b, ids: (0, 0)),            # beta
            ],
            out_specs=pl.BlockSpec((1, TS, D), lambda st, b, ids: (b, st, 0)),
            scratch_shapes=[
                pltpu.VMEM((TS, D), tok_table.dtype),   # gathered token rows
                pltpu.SemaphoreType.DMA((NCHUNK,)),     # one sem per chunk
            ],
        ),
        compiler_params=pltpu.CompilerParams(**cp_kwargs),
    )(x32, seg3, tok_table, pos_table, seg_table, gamma2, beta2)


def reference(x, seg, tok_table, pos_table, seg_table, gamma, beta):
    S = x.shape[1]
    emb = tok_table[x] + pos_table[jnp.arange(S)][None, :, :] + seg_table[seg]
    mean = jnp.mean(emb, axis=-1, keepdims=True)
    var = jnp.mean((emb - mean) ** 2, axis=-1, keepdims=True)
    return (emb - mean) * jax.lax.rsqrt(var + LN_EPS) * gamma + beta


if __name__ == "__main__":
    # Small shapes consistent with the module's forward:
    vocab_size, d_model, maxlen, n_segments = 50, 32, 16, 2
    B, S = 2, 8

    key = jax.random.PRNGKey(0)
    k1, k2, k3, k4, k5 = jax.random.split(key, 5)

    # Deterministic parameter init (nn.Embedding ~ N(0,1); LayerNorm gamma=1, beta=0).
    tok_table = jax.random.normal(k1, (vocab_size, d_model), dtype=jnp.float32)
    pos_table = jax.random.normal(k2, (maxlen, d_model), dtype=jnp.float32)
    seg_table = jax.random.normal(k3, (n_segments, d_model), dtype=jnp.float32)
    gamma = jnp.ones((d_model,), dtype=jnp.float32)
    beta = jnp.zeros((d_model,), dtype=jnp.float32)

    x = jax.random.randint(k4, (B, S), 0, vocab_size, dtype=jnp.int32)
    seg = jax.random.randint(k5, (B, S), 0, n_segments, dtype=jnp.int32)

    out = bert_embedding(x, seg, tok_table, pos_table, seg_table, gamma, beta)
    out = jax.block_until_ready(out)

    ref = reference(x, seg, tok_table, pos_table, seg_table, gamma, beta)
    assert out.shape == (B, S, d_model)
    assert jnp.allclose(out, ref, atol=1e-4, rtol=1e-4), "mismatch vs reference"

    print("KERNEL_OK")
</pallas_src>

<mosaic_0001>
module attributes {stable_mosaic.version = 11 : i64} {
  func.func @kernel(%arg0: i32, %arg1: i32, %arg2: memref<2x8xi32, #tpu.memory_space<smem>>, %arg3: memref<1x8x1xi32, #tpu.memory_space<vmem>>, %arg4: memref<50x32xf32, #tpu.memory_space<any>>, %arg5: memref<8x32xf32, #tpu.memory_space<vmem>>, %arg6: memref<2x32xf32, #tpu.memory_space<vmem>>, %arg7: memref<1x32xf32, #tpu.memory_space<vmem>>, %arg8: memref<1x32xf32, #tpu.memory_space<vmem>>, %arg9: memref<1x8x32xf32, #tpu.memory_space<vmem>>, %arg10: memref<8x32xf32, #tpu.memory_space<vmem>>, %arg11: memref<1x!tpu.dma_semaphore, #tpu.memory_space<semaphore_mem>>) attributes {dimension_semantics = [#tpu.dimension_semantics<parallel>, #tpu.dimension_semantics<parallel>], iteration_bounds = array<i64: 1, 2>, scalar_prefetch = 1 : i64, scratch_operands = 2 : i64, tpu.core_type = #tpu.core_type<tc>, window_params = [{transform_indices = @transform_0, window_bounds = array<i64: 1, 8, 1>}, {}, {transform_indices = @transform_2, window_bounds = array<i64: 8, 32>}, {pipeline_mode = #tpu.pipeline_mode<synchronous>, transform_indices = @transform_3, window_bounds = array<i64: 2, 32>}, {pipeline_mode = #tpu.pipeline_mode<synchronous>, transform_indices = @transform_4, window_bounds = array<i64: 1, 32>}, {pipeline_mode = #tpu.pipeline_mode<synchronous>, transform_indices = @transform_5, window_bounds = array<i64: 1, 32>}, {transform_indices = @transform_6, window_bounds = array<i64: 1, 8, 32>}]} {
    %c8_i32 = arith.constant 8 : i32
    %0 = arith.muli %arg0, %c8_i32 : i32
    %c0_i32 = arith.constant 0 : i32
    %c0_i32_0 = arith.constant 0 : i32
    %1 = arith.addi %c0_i32_0, %c0_i32 : i32
    %2 = arith.addi %0, %1 : i32
    %3 = arith.index_cast %arg1 : i32 to index
    %4 = arith.index_cast %2 : i32 to index
    %5 = memref.load %arg2[%3, %4] : memref<2x8xi32, #tpu.memory_space<smem>>
    %c0_i32_1 = arith.constant 0 : i32
    %c0_i32_2 = arith.constant 0 : i32
    %6 = tpu.memref_slice %arg4[%5, %c0_i32_2] : memref<50x32xf32, #tpu.memory_space<any>> -> memref<1x32xf32, #tpu.memory_space<any>>
    %c0_i32_3 = arith.constant 0 : i32
    %7 = tpu.memref_slice %arg10[%1, %c0_i32_3] : memref<8x32xf32, #tpu.memory_space<vmem>> -> memref<1x32xf32, #tpu.memory_space<vmem>>
    %8 = tpu.memref_slice %arg11[%c0_i32_1] : memref<1x!tpu.dma_semaphore, #tpu.memory_space<semaphore_mem>> -> memref<1x!tpu.dma_semaphore, #tpu.memory_space<semaphore_mem>>
    %9 = tpu.memref_squeeze %8 : memref<1x!tpu.dma_semaphore, #tpu.memory_space<semaphore_mem>> -> memref<!tpu.dma_semaphore, #tpu.memory_space<semaphore_mem>>
    tpu.enqueue_dma source(%6 : memref<1x32xf32, #tpu.memory_space<any>>) target(%7 : memref<1x32xf32, #tpu.memory_space<vmem>>) target_semaphore(%9 : memref<!tpu.dma_semaphore, #tpu.memory_space<semaphore_mem>>)
    %c1_i32 = arith.constant 1 : i32
    %c0_i32_4 = arith.constant 0 : i32
    %10 = arith.addi %c0_i32_4, %c1_i32 : i32
    %11 = arith.addi %0, %10 : i32
    %12 = arith.index_cast %arg1 : i32 to index
    %13 = arith.index_cast %11 : i32 to index
    %14 = memref.load %arg2[%12, %13] : memref<2x8xi32, #tpu.memory_space<smem>>
    %c0_i32_5 = arith.constant 0 : i32
    %c0_i32_6 = arith.constant 0 : i32
    %15 = tpu.memref_slice %arg4[%14, %c0_i32_6] : memref<50x32xf32, #tpu.memory_space<any>> -> memref<1x32xf32, #tpu.memory_space<any>>
    %c0_i32_7 = arith.constant 0 : i32
    %16 = tpu.memref_slice %arg10[%10, %c0_i32_7] : memref<8x32xf32, #tpu.memory_space<vmem>> -> memref<1x32xf32, #tpu.memory_space<vmem>>
    %17 = tpu.memref_slice %arg11[%c0_i32_5] : memref<1x!tpu.dma_semaphore, #tpu.memory_space<semaphore_mem>> -> memref<1x!tpu.dma_semaphore, #tpu.memory_space<semaphore_mem>>
    %18 = tpu.memref_squeeze %17 : memref<1x!tpu.dma_semaphore, #tpu.memory_space<semaphore_mem>> -> memref<!tpu.dma_semaphore, #tpu.memory_space<semaphore_mem>>
    tpu.enqueue_dma source(%15 : memref<1x32xf32, #tpu.memory_space<any>>) target(%16 : memref<1x32xf32, #tpu.memory_space<vmem>>) target_semaphore(%18 : memref<!tpu.dma_semaphore, #tpu.memory_space<semaphore_mem>>)
    %c2_i32 = arith.constant 2 : i32
    %c0_i32_8 = arith.constant 0 : i32
    %19 = arith.addi %c0_i32_8, %c2_i32 : i32
    %20 = arith.addi %0, %19 : i32
    %21 = arith.index_cast %arg1 : i32 to index
    %22 = arith.index_cast %20 : i32 to index
    %23 = memref.load %arg2[%21, %22] : memref<2x8xi32, #tpu.memory_space<smem>>
    %c0_i32_9 = arith.constant 0 : i32
    %c0_i32_10 = arith.constant 0 : i32
    %24 = tpu.memref_slice %arg4[%23, %c0_i32_10] : memref<50x32xf32, #tpu.memory_space<any>> -> memref<1x32xf32, #tpu.memory_space<any>>
    %c0_i32_11 = arith.constant 0 : i32
    %25 = tpu.memref_slice %arg10[%19, %c0_i32_11] : memref<8x32xf32, #tpu.memory_space<vmem>> -> memref<1x32xf32, #tpu.memory_space<vmem>>
    %26 = tpu.memref_slice %arg11[%c0_i32_9] : memref<1x!tpu.dma_semaphore, #tpu.memory_space<semaphore_mem>> -> memref<1x!tpu.dma_semaphore, #tpu.memory_space<semaphore_mem>>
    %27 = tpu.memref_squeeze %26 : memref<1x!tpu.dma_semaphore, #tpu.memory_space<semaphore_mem>> -> memref<!tpu.dma_semaphore, #tpu.memory_space<semaphore_mem>>
    tpu.enqueue_dma source(%24 : memref<1x32xf32, #tpu.memory_space<any>>) target(%25 : memref<1x32xf32, #tpu.memory_space<vmem>>) target_semaphore(%27 : memref<!tpu.dma_semaphore, #tpu.memory_space<semaphore_mem>>)
    %c3_i32 = arith.constant 3 : i32
    %c0_i32_12 = arith.constant 0 : i32
    %28 = arith.addi %c0_i32_12, %c3_i32 : i32
    %29 = arith.addi %0, %28 : i32
    %30 = arith.index_cast %arg1 : i32 to index
    %31 = arith.index_cast %29 : i32 to index
    %32 = memref.load %arg2[%30, %31] : memref<2x8xi32, #tpu.memory_space<smem>>
    %c0_i32_13 = arith.constant 0 : i32
    %c0_i32_14 = arith.constant 0 : i32
    %33 = tpu.memref_slice %arg4[%32, %c0_i32_14] : memref<50x32xf32, #tpu.memory_space<any>> -> memref<1x32xf32, #tpu.memory_space<any>>
    %c0_i32_15 = arith.constant 0 : i32
    %34 = tpu.memref_slice %arg10[%28, %c0_i32_15] : memref<8x32xf32, #tpu.memory_space<vmem>> -> memref<1x32xf32, #tpu.memory_space<vmem>>
    %35 = tpu.memref_slice %arg11[%c0_i32_13] : memref<1x!tpu.dma_semaphore, #tpu.memory_space<semaphore_mem>> -> memref<1x!tpu.dma_semaphore, #tpu.memory_space<semaphore_mem>>
    %36 = tpu.memref_squeeze %35 : memref<1x!tpu.dma_semaphore, #tpu.memory_space<semaphore_mem>> -> memref<!tpu.dma_semaphore, #tpu.memory_space<semaphore_mem>>
    tpu.enqueue_dma source(%33 : memref<1x32xf32, #tpu.memory_space<any>>) target(%34 : memref<1x32xf32, #tpu.memory_space<vmem>>) target_semaphore(%36 : memref<!tpu.dma_semaphore, #tpu.memory_space<semaphore_mem>>)
    %c4_i32 = arith.constant 4 : i32
    %c0_i32_16 = arith.constant 0 : i32
    %37 = arith.addi %c0_i32_16, %c4_i32 : i32
    %38 = arith.addi %0, %37 : i32
    %39 = arith.index_cast %arg1 : i32 to index
    %40 = arith.index_cast %38 : i32 to index
    %41 = memref.load %arg2[%39, %40] : memref<2x8xi32, #tpu.memory_space<smem>>
    %c0_i32_17 = arith.constant 0 : i32
    %c0_i32_18 = arith.constant 0 : i32
    %42 = tpu.memref_slice %arg4[%41, %c0_i32_18] : memref<50x32xf32, #tpu.memory_space<any>> -> memref<1x32xf32, #tpu.memory_space<any>>
    %c0_i32_19 = arith.constant 0 : i32
    %43 = tpu.memref_slice %arg10[%37, %c0_i32_19] : memref<8x32xf32, #tpu.memory_space<vmem>> -> memref<1x32xf32, #tpu.memory_space<vmem>>
    %44 = tpu.memref_slice %arg11[%c0_i32_17] : memref<1x!tpu.dma_semaphore, #tpu.memory_space<semaphore_mem>> -> memref<1x!tpu.dma_semaphore, #tpu.memory_space<semaphore_mem>>
    %45 = tpu.memref_squeeze %44 : memref<1x!tpu.dma_semaphore, #tpu.memory_space<semaphore_mem>> -> memref<!tpu.dma_semaphore, #tpu.memory_space<semaphore_mem>>
    tpu.enqueue_dma source(%42 : memref<1x32xf32, #tpu.memory_space<any>>) target(%43 : memref<1x32xf32, #tpu.memory_space<vmem>>) target_semaphore(%45 : memref<!tpu.dma_semaphore, #tpu.memory_space<semaphore_mem>>)
    %c5_i32 = arith.constant 5 : i32
    %c0_i32_20 = arith.constant 0 : i32
    %46 = arith.addi %c0_i32_20, %c5_i32 : i32
    %47 = arith.addi %0, %46 : i32
    %48 = arith.index_cast %arg1 : i32 to index
    %49 = arith.index_cast %47 : i32 to index
    %50 = memref.load %arg2[%48, %49] : memref<2x8xi32, #tpu.memory_space<smem>>
    %c0_i32_21 = arith.constant 0 : i32
    %c0_i32_22 = arith.constant 0 : i32
    %51 = tpu.memref_slice %arg4[%50, %c0_i32_22] : memref<50x32xf32, #tpu.memory_space<any>> -> memref<1x32xf32, #tpu.memory_space<any>>
    %c0_i32_23 = arith.constant 0 : i32
    %52 = tpu.memref_slice %arg10[%46, %c0_i32_23] : memref<8x32xf32, #tpu.memory_space<vmem>> -> memref<1x32xf32, #tpu.memory_space<vmem>>
    %53 = tpu.memref_slice %arg11[%c0_i32_21] : memref<1x!tpu.dma_semaphore, #tpu.memory_space<semaphore_mem>> -> memref<1x!tpu.dma_semaphore, #tpu.memory_space<semaphore_mem>>
    %54 = tpu.memref_squeeze %53 : memref<1x!tpu.dma_semaphore, #tpu.memory_space<semaphore_mem>> -> memref<!tpu.dma_semaphore, #tpu.memory_space<semaphore_mem>>
    tpu.enqueue_dma source(%51 : memref<1x32xf32, #tpu.memory_space<any>>) target(%52 : memref<1x32xf32, #tpu.memory_space<vmem>>) target_semaphore(%54 : memref<!tpu.dma_semaphore, #tpu.memory_space<semaphore_mem>>)
    %c6_i32 = arith.constant 6 : i32
    %c0_i32_24 = arith.constant 0 : i32
    %55 = arith.addi %c0_i32_24, %c6_i32 : i32
    %56 = arith.addi %0, %55 : i32
    %57 = arith.index_cast %arg1 : i32 to index
    %58 = arith.index_cast %56 : i32 to index
    %59 = memref.load %arg2[%57, %58] : memref<2x8xi32, #tpu.memory_space<smem>>
    %c0_i32_25 = arith.constant 0 : i32
    %c0_i32_26 = arith.constant 0 : i32
    %60 = tpu.memref_slice %arg4[%59, %c0_i32_26] : memref<50x32xf32, #tpu.memory_space<any>> -> memref<1x32xf32, #tpu.memory_space<any>>
    %c0_i32_27 = arith.constant 0 : i32
    %61 = tpu.memref_slice %arg10[%55, %c0_i32_27] : memref<8x32xf32, #tpu.memory_space<vmem>> -> memref<1x32xf32, #tpu.memory_space<vmem>>
    %62 = tpu.memref_slice %arg11[%c0_i32_25] : memref<1x!tpu.dma_semaphore, #tpu.memory_space<semaphore_mem>> -> memref<1x!tpu.dma_semaphore, #tpu.memory_space<semaphore_mem>>
    %63 = tpu.memref_squeeze %62 : memref<1x!tpu.dma_semaphore, #tpu.memory_space<semaphore_mem>> -> memref<!tpu.dma_semaphore, #tpu.memory_space<semaphore_mem>>
    tpu.enqueue_dma source(%60 : memref<1x32xf32, #tpu.memory_space<any>>) target(%61 : memref<1x32xf32, #tpu.memory_space<vmem>>) target_semaphore(%63 : memref<!tpu.dma_semaphore, #tpu.memory_space<semaphore_mem>>)
    %c7_i32 = arith.constant 7 : i32
    %c0_i32_28 = arith.constant 0 : i32
    %64 = arith.addi %c0_i32_28, %c7_i32 : i32
    %65 = arith.addi %0, %64 : i32
    %66 = arith.index_cast %arg1 : i32 to index
    %67 = arith.index_cast %65 : i32 to index
    %68 = memref.load %arg2[%66, %67] : memref<2x8xi32, #tpu.memory_space<smem>>
    %c0_i32_29 = arith.constant 0 : i32
    %c0_i32_30 = arith.constant 0 : i32
    %69 = tpu.memref_slice %arg4[%68, %c0_i32_30] : memref<50x32xf32, #tpu.memory_space<any>> -> memref<1x32xf32, #tpu.memory_space<any>>
    %c0_i32_31 = arith.constant 0 : i32
    %70 = tpu.memref_slice %arg10[%64, %c0_i32_31] : memref<8x32xf32, #tpu.memory_space<vmem>> -> memref<1x32xf32, #tpu.memory_space<vmem>>
    %71 = tpu.memref_slice %arg11[%c0_i32_29] : memref<1x!tpu.dma_semaphore, #tpu.memory_space<semaphore_mem>> -> memref<1x!tpu.dma_semaphore, #tpu.memory_space<semaphore_mem>>
    %72 = tpu.memref_squeeze %71 : memref<1x!tpu.dma_semaphore, #tpu.memory_space<semaphore_mem>> -> memref<!tpu.dma_semaphore, #tpu.memory_space<semaphore_mem>>
    tpu.enqueue_dma source(%69 : memref<1x32xf32, #tpu.memory_space<any>>) target(%70 : memref<1x32xf32, #tpu.memory_space<vmem>>) target_semaphore(%72 : memref<!tpu.dma_semaphore, #tpu.memory_space<semaphore_mem>>)
    %c8_i32_32 = arith.constant 8 : i32
    %c0 = arith.constant 0 : index
    %c0_33 = arith.constant 0 : index
    %73 = vector.load %arg7[%c0, %c0_33] : memref<1x32xf32, #tpu.memory_space<vmem>>, vector<1x32xf32>
    %74 = vector.shape_cast %73 : vector<1x32xf32> to vector<32xf32>
    %75 = vector.shape_cast %74 : vector<32xf32> to vector<1x32xf32>
    %c0_34 = arith.constant 0 : index
    %c0_35 = arith.constant 0 : index
    %76 = vector.load %arg8[%c0_34, %c0_35] : memref<1x32xf32, #tpu.memory_space<vmem>>, vector<1x32xf32>
    %77 = vector.shape_cast %76 : vector<1x32xf32> to vector<32xf32>
    %78 = vector.shape_cast %77 : vector<32xf32> to vector<1x32xf32>
    %c0_36 = arith.constant 0 : index
    %c0_37 = arith.constant 0 : index
    %79 = vector.load %arg6[%c0_36, %c0_37] : memref<2x32xf32, #tpu.memory_space<vmem>>, vector<1x32xf32>
    %80 = vector.shape_cast %79 : vector<1x32xf32> to vector<32xf32>
    %81 = vector.shape_cast %80 : vector<32xf32> to vector<1x32xf32>
    %c1 = arith.constant 1 : index
    %c0_38 = arith.constant 0 : index
    %82 = vector.load %arg6[%c1, %c0_38] : memref<2x32xf32, #tpu.memory_space<vmem>>, vector<1x32xf32>
    %83 = vector.shape_cast %82 : vector<1x32xf32> to vector<32xf32>
    %c0_39 = arith.constant 0 : index
    %c0_40 = arith.constant 0 : index
    %84 = vector.load %arg6[%c0_39, %c0_40] : memref<2x32xf32, #tpu.memory_space<vmem>>, vector<1x32xf32>
    %85 = vector.shape_cast %84 : vector<1x32xf32> to vector<32xf32>
    %86 = arith.subf %83, %85 : vector<32xf32>
    %87 = vector.shape_cast %86 : vector<32xf32> to vector<1x32xf32>
    %c0_i32_41 = arith.constant 0 : i32
    %c0_i32_42 = arith.constant 0 : i32
    %c0_i32_43 = arith.constant 0 : i32
    %88 = tpu.memref_slice %arg4[%c0_i32_42, %c0_i32_43] : memref<50x32xf32, #tpu.memory_space<any>> -> memref<8x32xf32, #tpu.memory_space<any>>
    %c0_i32_44 = arith.constant 0 : i32
    %c0_i32_45 = arith.constant 0 : i32
    %89 = tpu.memref_slice %arg10[%c0_i32_44, %c0_i32_45] : memref<8x32xf32, #tpu.memory_space<vmem>> -> memref<8x32xf32, #tpu.memory_space<vmem>>
    %90 = tpu.memref_slice %arg11[%c0_i32_41] : memref<1x!tpu.dma_semaphore, #tpu.memory_space<semaphore_mem>> -> memref<1x!tpu.dma_semaphore, #tpu.memory_space<semaphore_mem>>
    %91 = tpu.memref_squeeze %90 : memref<1x!tpu.dma_semaphore, #tpu.memory_space<semaphore_mem>> -> memref<!tpu.dma_semaphore, #tpu.memory_space<semaphore_mem>>
    tpu.wait_dma2 semaphore(%91 : memref<!tpu.dma_semaphore, #tpu.memory_space<semaphore_mem>>) src(%88 : memref<8x32xf32, #tpu.memory_space<any>>) dst(%89 : memref<8x32xf32, #tpu.memory_space<vmem>>)
    %c0_46 = arith.constant 0 : index
    %c0_47 = arith.constant 0 : index
    %92 = vector.load %arg10[%c0_46, %c0_47] : memref<8x32xf32, #tpu.memory_space<vmem>>, vector<8x32xf32>
    %c0_48 = arith.constant 0 : index
    %c0_49 = arith.constant 0 : index
    %93 = vector.load %arg5[%c0_48, %c0_49] : memref<8x32xf32, #tpu.memory_space<vmem>>, vector<8x32xf32>
    %c0_50 = arith.constant 0 : index
    %c0_51 = arith.constant 0 : index
    %c0_52 = arith.constant 0 : index
    %94 = vector.load %arg3[%c0_50, %c0_51, %c0_52] : memref<1x8x1xi32, #tpu.memory_space<vmem>>, vector<1x8x1xi32>
    %95 = vector.shape_cast %94 : vector<1x8x1xi32> to vector<8x1xi32>
    %c1_i32_53 = arith.constant 1 : i32
    %96 = vector.broadcast %c1_i32_53 : i32 to vector<8x1xi32>
    %97 = arith.cmpi eq, %95, %96 : vector<8x1xi32>
    %98 = arith.extui %97 : vector<8x1xi1> to vector<8x1xi32>
    %99 = arith.sitofp %98 : vector<8x1xi32> to vector<8x1xf32>
    %100 = vector.broadcast %99 : vector<8x1xf32> to vector<8x32xf32>
    %101 = vector.broadcast %87 : vector<1x32xf32> to vector<8x32xf32>
    %102 = arith.mulf %100, %101 : vector<8x32xf32>
    %103 = vector.broadcast %81 : vector<1x32xf32> to vector<8x32xf32>
    %104 = arith.addf %103, %102 : vector<8x32xf32>
    %105 = arith.addf %92, %93 : vector<8x32xf32>
    %106 = arith.addf %105, %104 : vector<8x32xf32>
    %cst = arith.constant dense<0.000000e+00> : vector<8xf32>
    %107 = vector.multi_reduction <add>, %106, %cst [1] : vector<8x32xf32> to vector<8xf32>
    %108 = vector.shape_cast %107 : vector<8xf32> to vector<8x1xf32>
    %cst_54 = arith.constant 3.200000e+01 : f32
    %109 = vector.broadcast %cst_54 : f32 to vector<8x1xf32>
    %110 = arith.divf %108, %109 : vector<8x1xf32>
    %111 = vector.broadcast %110 : vector<8x1xf32> to vector<8x32xf32>
    %112 = arith.subf %106, %111 : vector<8x32xf32>
    %113 = arith.mulf %112, %112 : vector<8x32xf32>
    %cst_55 = arith.constant dense<0.000000e+00> : vector<8xf32>
    %114 = vector.multi_reduction <add>, %113, %cst_55 [1] : vector<8x32xf32> to vector<8xf32>
    %115 = vector.shape_cast %114 : vector<8xf32> to vector<8x1xf32>
    %cst_56 = arith.constant 3.200000e+01 : f32
    %116 = vector.broadcast %cst_56 : f32 to vector<8x1xf32>
    %117 = arith.divf %115, %116 : vector<8x1xf32>
    %cst_57 = arith.constant 9.99999974E-6 : f32
    %118 = vector.broadcast %cst_57 : f32 to vector<8x1xf32>
    %119 = arith.addf %117, %118 : vector<8x1xf32>
    %120 = math.rsqrt %119 : vector<8x1xf32>
    %121 = vector.broadcast %120 : vector<8x1xf32> to vector<8x32xf32>
    %122 = arith.mulf %112, %121 : vector<8x32xf32>
    %123 = vector.broadcast %75 : vector<1x32xf32> to vector<8x32xf32>
    %124 = arith.mulf %122, %123 : vector<8x32xf32>
    %125 = vector.broadcast %78 : vector<1x32xf32> to vector<8x32xf32>
    %126 = arith.addf %124, %125 : vector<8x32xf32>
    %c0_58 = arith.constant 0 : index
    %c0_59 = arith.constant 0 : index
    %c0_60 = arith.constant 0 : index
    %127 = vector.load %arg9[%c0_58, %c0_59, %c0_60] : memref<1x8x32xf32, #tpu.memory_space<vmem>>, vector<1x8x32xf32>
    %128 = vector.shape_cast %127 : vector<1x8x32xf32> to vector<8x32xf32>
    %129 = vector.shape_cast %126 : vector<8x32xf32> to vector<1x8x32xf32>
    tpu.vector_store %arg9[%c0_58, %c0_59, %c0_60], %129 {strides = array<i32>} : memref<1x8x32xf32, #tpu.memory_space<vmem>>, vector<1x8x32xf32>,
    return
  }
  func.func @transform_0(%arg0: i32, %arg1: i32, %arg2: memref<2x8xi32, #tpu.memory_space<smem>>) -> (i32, i32, i32) {
    %c0_i32 = arith.constant 0 : i32
    %c0_i32_0 = arith.constant 0 : i32
    return %arg1, %arg0, %c0_i32 : i32, i32, i32
  }
  func.func @transform_2(%arg0: i32, %arg1: i32, %arg2: memref<2x8xi32, #tpu.memory_space<smem>>) -> (i32, i32) {
    %c0_i32 = arith.constant 0 : i32
    %c0_i32_0 = arith.constant 0 : i32
    return %arg0, %c0_i32 : i32, i32
  }
  func.func @transform_3(%arg0: i32, %arg1: i32, %arg2: memref<2x8xi32, #tpu.memory_space<smem>>) -> (i32, i32) {
    %c0_i32 = arith.constant 0 : i32
    %c0_i32_0 = arith.constant 0 : i32
    %c0_i32_1 = arith.constant 0 : i32
    return %c0_i32, %c0_i32_0 : i32, i32
  }
  func.func @transform_4(%arg0: i32, %arg1: i32, %arg2: memref<2x8xi32, #tpu.memory_space<smem>>) -> (i32, i32) {
    %c0_i32 = arith.constant 0 : i32
    %c0_i32_0 = arith.constant 0 : i32
    %c0_i32_1 = arith.constant 0 : i32
    return %c0_i32, %c0_i32_0 : i32, i32
  }
  func.func @transform_5(%arg0: i32, %arg1: i32, %arg2: memref<2x8xi32, #tpu.memory_space<smem>>) -> (i32, i32) {
    %c0_i32 = arith.constant 0 : i32
    %c0_i32_0 = arith.constant 0 : i32
    %c0_i32_1 = arith.constant 0 : i32
    return %c0_i32, %c0_i32_0 : i32, i32
  }
  func.func @transform_6(%arg0: i32, %arg1: i32, %arg2: memref<2x8xi32, #tpu.memory_space<smem>>) -> (i32, i32, i32) {
    %c0_i32 = arith.constant 0 : i32
    %c0_i32_0 = arith.constant 0 : i32
    return %arg1, %arg0, %c0_i32 : i32, i32, i32
  }
}

</mosaic_0001>

<llo_original>
// kernel: tpu_custom_call.1
$region0: #{tpu_custom_call.1}
  #allocation0 [shape = 'u32[]', space=smem, size = 0x4, offset = 0x4, fixed_abs, tag = 'smem constant byte address 0x4 - core index']
  #allocation1 [shape = 'u32[72,128]{1,0:T(1,128)}', space=vmem, size = 0x9000, scoped, tag = 'internal scratch']
  #allocation2 [shape = 'f32[8,32]{1,0:T(8,128)}', space=vmem, size = 0x1000, scoped, tag = 'scratch operand']
  #allocation3 [shape = 's32[1]{0}', space=sflag, size = 0x4, scoped, tag = 'scratch operand']
  #allocation4 [shape = 's32[1]{0}', space=sflag, size = 0x4, scoped, tag = 'scoped memory for tpu_custom_call.1']
  #allocation5 [shape = 'u8[1024]{0}', space=smem, size = 0x400, scoped, tag = 'prefetched SMEM operand 0']
  #allocation8 [shape = 's32[]', space=sflag, size = 0x4, offset = 0, fixed_abs, tag = 'sflag constant byte address 0x0 - dummy sync flag']
  #allocation9 [shape = 's32[]', space=sflag, size = 0x4, offset = 0, fixed_abs, tag = 'sflag constant byte address 0x0 - dummy sync flag']
  #allocation10 [shape = 's32[]', space=sflag, size = 0x4, offset = 0, fixed_abs, tag = 'sflag constant byte address 0x0 - dummy sync flag']
  #allocation11 [shape = 's32[]', space=sflag, size = 0x4, offset = 0, fixed_abs, tag = 'sflag constant byte address 0x0 - dummy sync flag']
  #allocation12 [shape = 's32[]', space=sflag, size = 0x4, offset = 0, fixed_abs, tag = 'sflag constant byte address 0x0 - dummy sync flag']
  #allocation13 [shape = 's32[]', space=sflag, size = 0x4, offset = 0, fixed_abs, tag = 'sflag constant byte address 0x0 - dummy sync flag']
  #allocation14 [shape = 's32[]', space=sflag, size = 0x4, offset = 0, fixed_abs, tag = 'sflag constant byte address 0x0 - dummy sync flag']
  #allocation15 [shape = 's32[]', space=sflag, size = 0x4, offset = 0, fixed_abs, tag = 'sflag constant byte address 0x0 - dummy sync flag']
  %s0 = inlined_call_operand.vmem [shape: s32[2,8], index: 0, kind: input, shape index: {}]
  %s1 = inlined_call_operand.vmem [shape: s32[2,8,1], index: 1, kind: input, shape index: {}]
  %s2 = inlined_call_operand.vmem [shape: f32[50,32], index: 2, kind: input, shape index: {}]
  %s3 = inlined_call_operand.vmem [shape: f32[16,32], index: 3, kind: input, shape index: {}]
  %s4 = inlined_call_operand.vmem [shape: f32[2,32], index: 4, kind: input, shape index: {}]
  %s5 = inlined_call_operand.vmem [shape: f32[1,32], index: 5, kind: input, shape index: {}]
  %s6 = inlined_call_operand.vmem [shape: f32[1,32], index: 6, kind: input, shape index: {}]
  %s7 = inlined_call_operand.hbm [shape: f32[2,8,32], index: 7, kind: output, shape index: {}]
  %s8 = sld [smem:[#allocation0]]
  $region293: #{tpu_custom_call.1} parent=0
    _
  %s10 = ssub.s32 1, %s8
  %s11 = scalar_select 0, %s10, %s8
  %s13 = sshll.u32 %s0, 4
  %s14 = int_to_ptr.vmem [resolvable:$true] %s13
  %16 = dma.vmem_to_smem %s14, 32, [#allocation5], [#allocation4]
  %18 = dma.done [#allocation4], 32
  %19 = sfence
  $region1: #{tpu_custom_call.1} parent=0
    #allocation6 [shape = 'u8[8192]{0}', space=vmem, size = 0x2000, scoped, tag = 'output window, operand 0']
    #allocation7 [shape = 's32[2]{0}', space=sflag, size = 0x8, scoped, tag = 'scoped memory for tpu_custom_call.1']
    %20 = vsyncpa [#allocation7], 0
    %s21 = scalar_lea.sflag [#allocation7], 1
    %22 = vsyncpa %s21, 0
    loop: start=0, step=1, limit=4
    $region2: #{tpu_custom_call.1} parent=1 // loop_pre_header
      _
    $region3: #{tpu_custom_call.1} parent=1 // loop_header
      %s24 = sphi 0, %s28
      %p25 = scmp.ge.s32.totalorder %s24, 4
      %s31 = sphi 0, %s43
      %s32 = sphi 0, %s39
      %s33 = sphi 0, %s31
      %s34 = sphi 0, %s32
      %s35 = sphi 0, %s33
      %s36 = sphi 0, %s34
      %s48 = sphi 0, %s50
      %s51 = sphi 0, %s48
      %s52 = sphi 0, %s51
      %s68 = sphi 0, %s52
      %s74 = sphi 0, %s76
      %s77 = sphi 0, %s74
      %s78 = sphi 0, %s77
      %s94 = sphi 0, %s78
      %s98 = sphi 0, %s98
      %s100 = sphi 0, %s98
      %s101 = sphi 0, %s100
      %s115 = sphi 0, %s101
      %s119 = sphi 0, %s119
      %s121 = sphi 0, %s119
      %s122 = sphi 0, %s121
      %s136 = sphi 0, %s122
      %s140 = sphi 0, %s140
      %s142 = sphi 0, %s140
      %s143 = sphi 0, %s142
      %s157 = sphi 0, %s143
      %s165 = sphi 0, %s167
      %s168 = sphi 0, %s165
      %s169 = sphi 0, %s168
      %s185 = sphi 0, %s169
    $region4: #{tpu_custom_call.1} parent=1 // loop_header_branch
      %27 = sbr.rel (%p25) target = $region8
    $region5: #{tpu_custom_call.1} parent=1 // loop_body
      %s29 = ssub.s32 %s24, 1
      %s30 = ssub.s32 %s24, 2
      %s37 = sadd.s32 1, %s32
      %p38 = scmp.ge.s32.totalorder %s37, 2
      %s39 = scalar_select %p38, 0, %s37
      %s40 = sadd.s32 1, %s31
      %s41 = scalar_select %p38, %s40, %s31
      %p42 = scmp.ge.s32.totalorder %s41, 1
      %s43 = scalar_select %p42, 0, %s41
      %s44 = ssub.s32 %s32, %s39
      %s45 = ssub.s32 %s31, %s43
      %s46 = sor.u32 %s44, %s45
      %p47 = scmp.eq.s32.totalorder %s46, 0
      %s49 = sadd.s32 %s48, 1
      %s50 = scalar_select %p47, %s48, %s49
      %p53 = pneg %p47
      %p54 = scmp.eq.s32.totalorder %s24, 1
      %p55 = por %p53, %p54
      %p56 = scmp.ne.s32.totalorder %s48, %s51
      %p57 = scmp.eq.s32.totalorder %s24, 0
      %p58 = por %p56, %p57
      %p59 = scmp.ne.s32.totalorder %s48, %s51
      %p60 = scmp.eq.s32.totalorder %s29, 1
      %p61 = por %p59, %p60
      %p62 = scmp.ne.s32.totalorder %s51, %s52
      %p63 = scmp.eq.s32.totalorder %s29, 0
      %p64 = por %p62, %p63
      %p65 = scmp.ne.s32.totalorder %s51, %s52
      %p66 = scmp.eq.s32.totalorder %s30, 1
      %p67 = por %p65, %p66
      %p69 = scmp.ne.s32.totalorder %s52, %s68
      %p70 = scmp.eq.s32.totalorder %s30, 0
      %p71 = por %p69, %p70
      %s72 = ssub.s32 %s31, %s43
      %p73 = scmp.eq.s32.totalorder %s72, 0
      %s75 = sadd.s32 %s74, 1
      %s76 = scalar_select %p73, %s74, %s75
      %p79 = pneg %p73
      %p80 = scmp.eq.s32.totalorder %s24, 1
      %p81 = por %p79, %p80
      %p82 = scmp.ne.s32.totalorder %s74, %s77
      %p83 = scmp.eq.s32.totalorder %s24, 0
      %p84 = por %p82, %p83
      %p85 = scmp.ne.s32.totalorder %s74, %s77
      %p86 = scmp.eq.s32.totalorder %s29, 1
      %p87 = por %p85, %p86
      %p88 = scmp.ne.s32.totalorder %s77, %s78
      %p89 = scmp.eq.s32.totalorder %s29, 0
      %p90 = por %p88, %p89
      %p91 = scmp.ne.s32.totalorder %s77, %s78
      %p92 = scmp.eq.s32.totalorder %s30, 1
      %p93 = por %p91, %p92
      %p95 = scmp.ne.s32.totalorder %s78, %s94
      %p96 = scmp.eq.s32.totalorder %s30, 0
      %p97 = por %p95, %p96
      %s99 = sadd.s32 %s98, 1
      %p102 = scmp.eq.s32.totalorder %s24, 1
      %p103 = scmp.ne.s32.totalorder %s98, %s100
      %p104 = scmp.eq.s32.totalorder %s24, 0
      %p105 = por %p103, %p104
      %p106 = scmp.ne.s32.totalorder %s98, %s100
      %p107 = scmp.eq.s32.totalorder %s29, 1
      %p108 = por %p106, %p107
      %p109 = scmp.ne.s32.totalorder %s100, %s101
      %p110 = scmp.eq.s32.totalorder %s29, 0
      %p111 = por %p109, %p110
      %p112 = scmp.ne.s32.totalorder %s100, %s101
      %p113 = scmp.eq.s32.totalorder %s30, 1
      %p114 = por %p112, %p113
      %p116 = scmp.ne.s32.totalorder %s101, %s115
      %p117 = scmp.eq.s32.totalorder %s30, 0
      %p118 = por %p116, %p117
      %s120 = sadd.s32 %s119, 1
      %p123 = scmp.eq.s32.totalorder %s24, 1
      %p124 = scmp.ne.s32.totalorder %s119, %s121
      %p125 = scmp.eq.s32.totalorder %s24, 0
      %p126 = por %p124, %p125
      %p127 = scmp.ne.s32.totalorder %s119, %s121
      %p128 = scmp.eq.s32.totalorder %s29, 1
      %p129 = por %p127, %p128
      %p130 = scmp.ne.s32.totalorder %s121, %s122
      %p131 = scmp.eq.s32.totalorder %s29, 0
      %p132 = por %p130, %p131
      %p133 = scmp.ne.s32.totalorder %s121, %s122
      %p134 = scmp.eq.s32.totalorder %s30, 1
      %p135 = por %p133, %p134
      %p137 = scmp.ne.s32.totalorder %s122, %s136
      %p138 = scmp.eq.s32.totalorder %s30, 0
      %p139 = por %p137, %p138
      %s141 = sadd.s32 %s140, 1
      %p144 = scmp.eq.s32.totalorder %s24, 1
      %p145 = scmp.ne.s32.totalorder %s140, %s142
      %p146 = scmp.eq.s32.totalorder %s24, 0
      %p147 = por %p145, %p146
      %p148 = scmp.ne.s32.totalorder %s140, %s142
      %p149 = scmp.eq.s32.totalorder %s29, 1
      %p150 = por %p148, %p149
      %p151 = scmp.ne.s32.totalorder %s142, %s143
      %p152 = scmp.eq.s32.totalorder %s29, 0
      %p153 = por %p151, %p152
      %p154 = scmp.ne.s32.totalorder %s142, %s143
      %p155 = scmp.eq.s32.totalorder %s30, 1
      %p156 = por %p154, %p155
      %p158 = scmp.ne.s32.totalorder %s143, %s157
      %p159 = scmp.eq.s32.totalorder %s30, 0
      %p160 = por %p158, %p159
      %s161 = ssub.s32 %s32, %s39
      %s162 = ssub.s32 %s31, %s43
      %s163 = sor.u32 %s161, %s162
      %p164 = scmp.eq.s32.totalorder %s163, 0
      %s166 = sadd.s32 %s165, 1
      %s167 = scalar_select %p164, %s165, %s166
      %p170 = pneg %p164
      %p171 = scmp.eq.s32.totalorder %s24, 1
      %p172 = por %p170, %p171
      %p173 = scmp.ne.s32.totalorder %s165, %s168
      %p174 = scmp.eq.s32.totalorder %s24, 0
      %p175 = por %p173, %p174
      %p176 = scmp.ne.s32.totalorder %s165, %s168
      %p177 = scmp.eq.s32.totalorder %s29, 1
      %p178 = por %p176, %p177
      %p179 = scmp.ne.s32.totalorder %s168, %s169
      %p180 = scmp.eq.s32.totalorder %s29, 0
      %p181 = por %p179, %p180
      %p182 = scmp.ne.s32.totalorder %s168, %s169
      %p183 = scmp.eq.s32.totalorder %s30, 1
      %p184 = por %p182, %p183
      %p186 = scmp.ne.s32.totalorder %s169, %s185
      %p187 = scmp.eq.s32.totalorder %s30, 0
      %p188 = por %p186, %p187
      %p189 = scmp.le.s32.totalorder 1, %s24
      %p190 = scmp.lt.s32.totalorder %s24, 3
      %p191 = pnand %p189, %p190
      %p192 = pneg %p191
      // Predicated region
      $region9: #{tpu_custom_call.1} parent=5 // pred_check
        _
      $region10: #{tpu_custom_call.1} parent=5 // pred_check_branch
        %194 = sbr.rel (%p191) target = $region12
      $region11: #{tpu_custom_call.1} parent=5 // pred_region
        %s195 = ssub.s32 %s24, 1
        // Predicated region
        $region13: #{tpu_custom_call.1} parent=11 // pred_check
          %p196 = pneg %p90
        $region14: #{tpu_custom_call.1} parent=11 // pred_check_branch
          %198 = sbr.rel (%p196) target = $region16
        $region15: #{tpu_custom_call.1} parent=11 // pred_region
          %p199 = scmp.lt.s32.totalorder %s33, 1
          %s200 = scalar_select %p199, %s33, 1
          %s201 = smul.addr %s200, 8
          %s202 = scalar_lea.vmem %s3, %s201
        $region16: #{tpu_custom_call.1} parent=11 // pred_fallthru
          _
        // Predicated region
        $region17: #{tpu_custom_call.1} parent=11 // pred_check
          %p203 = pneg %p111
        $region18: #{tpu_custom_call.1} parent=11 // pred_check_branch
          %205 = sbr.rel (%p203) target = $region20
        $region19: #{tpu_custom_call.1} parent=11 // pred_region
          _
        $region20: #{tpu_custom_call.1} parent=11 // pred_fallthru
          _
        // Predicated region
        $region21: #{tpu_custom_call.1} parent=11 // pred_check
          %p206 = pneg %p132
        $region22: #{tpu_custom_call.1} parent=11 // pred_check_branch
          %208 = sbr.rel (%p206) target = $region24
        $region23: #{tpu_custom_call.1} parent=11 // pred_region
          _
        $region24: #{tpu_custom_call.1} parent=11 // pred_fallthru
          _
        // Predicated region
        $region25: #{tpu_custom_call.1} parent=11 // pred_check
          %p209 = pneg %p153
        $region26: #{tpu_custom_call.1} parent=11 // pred_check_branch
          %211 = sbr.rel (%p209) target = $region28
        $region27: #{tpu_custom_call.1} parent=11 // pred_region
          _
        $region28: #{tpu_custom_call.1} parent=11 // pred_fallthru
          _
      $region12: #{tpu_custom_call.1} parent=5 // pred_fallthru
        _
      %p212 = scmp.lt.s32.totalorder %s24, 2
      // Predicated region
      $region29: #{tpu_custom_call.1} parent=5 // pred_check
        %p213 = pneg %p212
      $region30: #{tpu_custom_call.1} parent=5 // pred_check_branch
        %215 = sbr.rel (%p213) target = $region32
      $region31: #{tpu_custom_call.1} parent=5 // pred_region
        // Predicated region
        $region33: #{tpu_custom_call.1} parent=31 // pred_check
          %p216 = pneg %p58
        $region34: #{tpu_custom_call.1} parent=31 // pred_check_branch
          %218 = sbr.rel (%p216) target = $region36
        $region35: #{tpu_custom_call.1} parent=31 // pred_region
          %p219 = scmp.lt.s32.totalorder %s32, 1
          %s220 = scalar_select %p219, %s32, 1
          %p221 = scmp.lt.s32.totalorder %s31, 0
          %s222 = scalar_select %p221, %s31, 0
          %s223 = sadd.s32 %s222, %s220
          %s224 = smul.addr %s223, 8
          %s225 = scalar_lea.vmem %s1, %s224
        $region36: #{tpu_custom_call.1} parent=31 // pred_fallthru
          _
      $region32: #{tpu_custom_call.1} parent=5 // pred_fallthru
        _
      %p226 = scmp.le.s32.totalorder 1, %s24
      %p227 = scmp.lt.s32.totalorder %s24, 3
      %p228 = pnand %p226, %p227
      %p229 = pneg %p228
      // Predicated region
      $region37: #{tpu_custom_call.1} parent=5 // pred_check
        _
      $region38: #{tpu_custom_call.1} parent=5 // pred_check_branch
        %231 = sbr.rel (%p228) target = $region40
      $region39: #{tpu_custom_call.1} parent=5 // pred_region
        %s232 = ssub.s32 %s24, 1
        %p233 = scmp.lt.s32.totalorder %s34, 1
        %s234 = scalar_select %p233, %s34, 1
        %p235 = scmp.lt.s32.totalorder %s33, 0
        %s236 = scalar_select %p235, %s33, 0
        %s237 = sadd.s32 %s236, %s234
        %s238 = smul.addr %s237, 8
        %s239 = scalar_lea.vmem %s1, %s238
        %p240 = pneg %p64
        %p241 = pneg %p61
        %p242 = scmp.lt.s32.totalorder %s33, 1
        %s243 = scalar_select %p242, %s33, 1
        %s244 = smul.addr %s243, 8
        %s245 = scalar_lea.vmem %s3, %s244
        %p246 = pneg %p90
        %p247 = pneg %p87
        %p248 = pneg %p111
        %p249 = pneg %p108
        %p250 = pneg %p132
        %p251 = pneg %p129
        %p252 = pneg %p153
        %p253 = pneg %p150
        %p254 = pneg %p181
        %p255 = pneg %p178
        %s256 = sand.u32 %s168, 1
        %s257 = scalar_lea.sflag [#allocation7], %s256
        %s258 = sand.u32 %s168, 1
        %s259 = smul.addr %s258, 8
        %s260 = scalar_lea.vmem [#allocation6], %s259
        %p261 = scmp.lt.s32.totalorder %s34, 1
        %s262 = scalar_select %p261, %s34, 1
        %p263 = scmp.lt.s32.totalorder %s33, 0
        %s264 = scalar_select %p263, %s33, 0
        %s265 = sadd.s32 %s264, %s262
        %s266 = smul.addr %s265, 8
        %s267 = scalar_lea.vmem %s1, %s266
        %p268 = scmp.lt.s32.totalorder %s33, 1
        %s269 = scalar_select %p268, %s33, 1
        %s270 = smul.addr %s269, 8
        %s271 = scalar_lea.vmem %s3, %s270
        %s272 = smul.u32 %s33, 8
        %s273 = sshra.s32 %s272, 7
        %s274 = sand.u32 %s272, 127
        %s275 = sadd.s32 %s273, %s34
        %s276 = smul.u32 %s275, 128
        %s277 = sshra.s32 %s272, 7
        %s278 = sand.u32 %s272, 127
        %s279 = sadd.s32 %s276, %s278
        %s280 = sld [smem:[#allocation5 + %s279]]
        %s281 = scalar_lea.vmem %s2, %s280
        // Predicated region
        $region41: #{tpu_custom_call.1} parent=39 // pred_check
          _
        $region42: #{tpu_custom_call.1} parent=39 // pred_check_branch
          %283 = sbr.rel target = $region44
        $region43: #{tpu_custom_call.1} parent=39 // pred_region
          // Predicated region
          $region56: #{tpu_custom_call.1} parent=43 // pred_check
            _
          $region57: #{tpu_custom_call.1} parent=43 // pred_check_branch
            %299 = sbr.rel (0) target = $region59
          $region58: #{tpu_custom_call.1} parent=43 // pred_region
            %s301 = ssub.s32 2, 1
            loop: start=0, step=1, limit=1
            $region60: #{tpu_custom_call.1} parent=58 // loop_pre_header
              _
            $region61: #{tpu_custom_call.1} parent=58 // loop_header
              %s303 = sphi 0, %s307
              %p304 = scmp.ge.s32.totalorder %s303, 1
              %s308 = sphi %s281, %s281
              %s309 = sphi [#allocation2], [#allocation2]
            $region62: #{tpu_custom_call.1} parent=58 // loop_header_branch
              %306 = sbr.rel (%p304) target = $region66
            $region63: #{tpu_custom_call.1} parent=58 // loop_body
              %v310 = vld [vmem:[%s308] sm:%s301]
              %311 = vst [vmem:[%s309] sm:%s301] %v310
            $region64: #{tpu_custom_call.1} parent=58 // loop_footer
              %s307 = sadd.s32 1, %s303
            $region65: #{tpu_custom_call.1} parent=58 // loop_footer_branch
              %302 = sbr.rel target = $region61
            $region66: #{tpu_custom_call.1} parent=58 // loop_exit
              _
          $region59: #{tpu_custom_call.1} parent=43 // pred_fallthru
            _
        $region44: #{tpu_custom_call.1} parent=39 // pred_fallthru
          _
        // Predicated region
        $region45: #{tpu_custom_call.1} parent=39 // pred_check
          _
        $region46: #{tpu_custom_call.1} parent=39 // pred_check_branch
          %285 = sbr.rel (0) target = $region48
        $region47: #{tpu_custom_call.1} parent=39 // pred_region
          %s287 = ssub.s32 2, 1
          loop: start=0, step=1, limit=1
          $region49: #{tpu_custom_call.1} parent=47 // loop_pre_header
            _
          $region50: #{tpu_custom_call.1} parent=47 // loop_header
            %s289 = sphi 0, %s293
            %p290 = scmp.ge.s32.totalorder %s289, 1
            %s294 = sphi %s281, %s281
            %s295 = sphi [#allocation2], [#allocation2]
          $region51: #{tpu_custom_call.1} parent=47 // loop_header_branch
            %292 = sbr.rel (%p290) target = $region55
          $region52: #{tpu_custom_call.1} parent=47 // loop_body
            %v296 = vld [vmem:[%s294] sm:%s287]
            %297 = vst [vmem:[%s295] sm:%s287] %v296
          $region53: #{tpu_custom_call.1} parent=47 // loop_footer
            %s293 = sadd.s32 1, %s289
          $region54: #{tpu_custom_call.1} parent=47 // loop_footer_branch
            %288 = sbr.rel target = $region50
          $region55: #{tpu_custom_call.1} parent=47 // loop_exit
            _
        $region48: #{tpu_custom_call.1} parent=39 // pred_fallthru
          _
        // Predicated region
        $region67: #{tpu_custom_call.1} parent=39 // pred_check
          _
        $region68: #{tpu_custom_call.1} parent=39 // pred_check_branch
          %314 = sbr.rel (0) target = $region70
        $region69: #{tpu_custom_call.1} parent=39 // pred_region
          %315 = vsyncadd [#allocation3], 16
        $region70: #{tpu_custom_call.1} parent=39 // pred_fallthru
          _
        %s316 = sadd.s32 %s272, 1
        %s317 = sshra.s32 %s316, 7
        %s318 = sand.u32 %s316, 127
        %s319 = sadd.s32 %s317, %s34
        %s320 = smul.u32 %s319, 128
        %s321 = sshra.s32 %s316, 7
        %s322 = sand.u32 %s316, 127
        %s323 = sadd.s32 %s320, %s322
        %s324 = sld [smem:[#allocation5 + %s323]]
        %s325 = scalar_lea.vmem %s2, %s324
        %s326 = scalar_lea.vmem [#allocation2], 1
        // Predicated region
        $region71: #{tpu_custom_call.1} parent=39 // pred_check
          _
        $region72: #{tpu_custom_call.1} parent=39 // pred_check_branch
          %328 = sbr.rel target = $region74
        $region73: #{tpu_custom_call.1} parent=39 // pred_region
          // Predicated region
          $region86: #{tpu_custom_call.1} parent=73 // pred_check
            _
          $region87: #{tpu_custom_call.1} parent=73 // pred_check_branch
            %344 = sbr.rel (0) target = $region89
          $region88: #{tpu_custom_call.1} parent=73 // pred_region
            %s346 = ssub.s32 2, 1
            loop: start=0, step=1, limit=1
            $region90: #{tpu_custom_call.1} parent=88 // loop_pre_header
              _
            $region91: #{tpu_custom_call.1} parent=88 // loop_header
              %s348 = sphi 0, %s352
              %p349 = scmp.ge.s32.totalorder %s348, 1
              %s353 = sphi %s325, %s325
              %s354 = sphi %s326, %s326
            $region92: #{tpu_custom_call.1} parent=88 // loop_header_branch
              %351 = sbr.rel (%p349) target = $region96
            $region93: #{tpu_custom_call.1} parent=88 // loop_body
              %v355 = vld [vmem:[%s353] sm:%s346]
              %356 = vst [vmem:[%s354] sm:%s346] %v355
            $region94: #{tpu_custom_call.1} parent=88 // loop_footer
              %s352 = sadd.s32 1, %s348
            $region95: #{tpu_custom_call.1} parent=88 // loop_footer_branch
              %347 = sbr.rel target = $region91
            $region96: #{tpu_custom_call.1} parent=88 // loop_exit
              _
          $region89: #{tpu_custom_call.1} parent=73 // pred_fallthru
            _
        $region74: #{tpu_custom_call.1} parent=39 // pred_fallthru
          _
        // Predicated region
        $region75: #{tpu_custom_call.1} parent=39 // pred_check
          _
        $region76: #{tpu_custom_call.1} parent=39 // pred_check_branch
          %330 = sbr.rel (0) target = $region78
        $region77: #{tpu_custom_call.1} parent=39 // pred_region
          %s332 = ssub.s32 2, 1
          loop: start=0, step=1, limit=1
          $region79: #{tpu_custom_call.1} parent=77 // loop_pre_header
            _
          $region80: #{tpu_custom_call.1} parent=77 // loop_header
            %s334 = sphi 0, %s338
            %p335 = scmp.ge.s32.totalorder %s334, 1
            %s339 = sphi %s325, %s325
            %s340 = sphi %s326, %s326
          $region81: #{tpu_custom_call.1} parent=77 // loop_header_branch
            %337 = sbr.rel (%p335) target = $region85
          $region82: #{tpu_custom_call.1} parent=77 // loop_body
            %v341 = vld [vmem:[%s339] sm:%s332]
            %342 = vst [vmem:[%s340] sm:%s332] %v341
          $region83: #{tpu_custom_call.1} parent=77 // loop_footer
            %s338 = sadd.s32 1, %s334
          $region84: #{tpu_custom_call.1} parent=77 // loop_footer_branch
            %333 = sbr.rel target = $region80
          $region85: #{tpu_custom_call.1} parent=77 // loop_exit
            _
        $region78: #{tpu_custom_call.1} parent=39 // pred_fallthru
          _
        // Predicated region
        $region97: #{tpu_custom_call.1} parent=39 // pred_check
          _
        $region98: #{tpu_custom_call.1} parent=39 // pred_check_branch
          %359 = sbr.rel (0) target = $region100
        $region99: #{tpu_custom_call.1} parent=39 // pred_region
          %360 = vsyncadd [#allocation3], 16
        $region100: #{tpu_custom_call.1} parent=39 // pred_fallthru
          _
        %s361 = sadd.s32 %s272, 2
        %s362 = sshra.s32 %s361, 7
        %s363 = sand.u32 %s361, 127
        %s364 = sadd.s32 %s362, %s34
        %s365 = smul.u32 %s364, 128
        %s366 = sshra.s32 %s361, 7
        %s367 = sand.u32 %s361, 127
        %s368 = sadd.s32 %s365, %s367
        %s369 = sld [smem:[#allocation5 + %s368]]
        %s370 = scalar_lea.vmem %s2, %s369
        %s371 = scalar_lea.vmem [#allocation2], 2
        // Predicated region
        $region101: #{tpu_custom_call.1} parent=39 // pred_check
          _
        $region102: #{tpu_custom_call.1} parent=39 // pred_check_branch
          %373 = sbr.rel target = $region104
        $region103: #{tpu_custom_call.1} parent=39 // pred_region
          // Predicated region
          $region116: #{tpu_custom_call.1} parent=103 // pred_check
            _
          $region117: #{tpu_custom_call.1} parent=103 // pred_check_branch
            %389 = sbr.rel (0) target = $region119
          $region118: #{tpu_custom_call.1} parent=103 // pred_region
            %s391 = ssub.s32 2, 1
            loop: start=0, step=1, limit=1
            $region120: #{tpu_custom_call.1} parent=118 // loop_pre_header
              _
            $region121: #{tpu_custom_call.1} parent=118 // loop_header
              %s393 = sphi 0, %s397
              %p394 = scmp.ge.s32.totalorder %s393, 1
              %s398 = sphi %s370, %s370
              %s399 = sphi %s371, %s371
            $region122: #{tpu_custom_call.1} parent=118 // loop_header_branch
              %396 = sbr.rel (%p394) target = $region126
            $region123: #{tpu_custom_call.1} parent=118 // loop_body
              %v400 = vld [vmem:[%s398] sm:%s391]
              %401 = vst [vmem:[%s399] sm:%s391] %v400
            $region124: #{tpu_custom_call.1} parent=118 // loop_footer
              %s397 = sadd.s32 1, %s393
            $region125: #{tpu_custom_call.1} parent=118 // loop_footer_branch
              %392 = sbr.rel target = $region121
            $region126: #{tpu_custom_call.1} parent=118 // loop_exit
              _
          $region119: #{tpu_custom_call.1} parent=103 // pred_fallthru
            _
        $region104: #{tpu_custom_call.1} parent=39 // pred_fallthru
          _
        // Predicated region
        $region105: #{tpu_custom_call.1} parent=39 // pred_check
          _
        $region106: #{tpu_custom_call.1} parent=39 // pred_check_branch
          %375 = sbr.rel (0) target = $region108
        $region107: #{tpu_custom_call.1} parent=39 // pred_region
          %s377 = ssub.s32 2, 1
          loop: start=0, step=1, limit=1
          $region109: #{tpu_custom_call.1} parent=107 // loop_pre_header
            _
          $region110: #{tpu_custom_call.1} parent=107 // loop_header
            %s379 = sphi 0, %s383
            %p380 = scmp.ge.s32.totalorder %s379, 1
            %s384 = sphi %s370, %s370
            %s385 = sphi %s371, %s371
          $region111: #{tpu_custom_call.1} parent=107 // loop_header_branch
            %382 = sbr.rel (%p380) target = $region115
          $region112: #{tpu_custom_call.1} parent=107 // loop_body
            %v386 = vld [vmem:[%s384] sm:%s377]
            %387 = vst [vmem:[%s385] sm:%s377] %v386
          $region113: #{tpu_custom_call.1} parent=107 // loop_footer
            %s383 = sadd.s32 1, %s379
          $region114: #{tpu_custom_call.1} parent=107 // loop_footer_branch
            %378 = sbr.rel target = $region110
          $region115: #{tpu_custom_call.1} parent=107 // loop_exit
            _
        $region108: #{tpu_custom_call.1} parent=39 // pred_fallthru
          _
        // Predicated region
        $region127: #{tpu_custom_call.1} parent=39 // pred_check
          _
        $region128: #{tpu_custom_call.1} parent=39 // pred_check_branch
          %404 = sbr.rel (0) target = $region130
        $region129: #{tpu_custom_call.1} parent=39 // pred_region
          %405 = vsyncadd [#allocation3], 16
        $region130: #{tpu_custom_call.1} parent=39 // pred_fallthru
          _
        %s406 = sadd.s32 %s272, 3
        %s407 = sshra.s32 %s406, 7
        %s408 = sand.u32 %s406, 127
        %s409 = sadd.s32 %s407, %s34
        %s410 = smul.u32 %s409, 128
        %s411 = sshra.s32 %s406, 7
        %s412 = sand.u32 %s406, 127
        %s413 = sadd.s32 %s410, %s412
        %s414 = sld [smem:[#allocation5 + %s413]]
        %s415 = scalar_lea.vmem %s2, %s414
        %s416 = scalar_lea.vmem [#allocation2], 3
        // Predicated region
        $region131: #{tpu_custom_call.1} parent=39 // pred_check
          _
        $region132: #{tpu_custom_call.1} parent=39 // pred_check_branch
          %418 = sbr.rel target = $region134
        $region133: #{tpu_custom_call.1} parent=39 // pred_region
          // Predicated region
          $region146: #{tpu_custom_call.1} parent=133 // pred_check
            _
          $region147: #{tpu_custom_call.1} parent=133 // pred_check_branch
            %434 = sbr.rel (0) target = $region149
          $region148: #{tpu_custom_call.1} parent=133 // pred_region
            %s436 = ssub.s32 2, 1
            loop: start=0, step=1, limit=1
            $region150: #{tpu_custom_call.1} parent=148 // loop_pre_header
              _
            $region151: #{tpu_custom_call.1} parent=148 // loop_header
              %s438 = sphi 0, %s442
              %p439 = scmp.ge.s32.totalorder %s438, 1
              %s443 = sphi %s415, %s415
              %s444 = sphi %s416, %s416
            $region152: #{tpu_custom_call.1} parent=148 // loop_header_branch
              %441 = sbr.rel (%p439) target = $region156
            $region153: #{tpu_custom_call.1} parent=148 // loop_body
              %v445 = vld [vmem:[%s443] sm:%s436]
              %446 = vst [vmem:[%s444] sm:%s436] %v445
            $region154: #{tpu_custom_call.1} parent=148 // loop_footer
              %s442 = sadd.s32 1, %s438
            $region155: #{tpu_custom_call.1} parent=148 // loop_footer_branch
              %437 = sbr.rel target = $region151
            $region156: #{tpu_custom_call.1} parent=148 // loop_exit
              _
          $region149: #{tpu_custom_call.1} parent=133 // pred_fallthru
            _
        $region134: #{tpu_custom_call.1} parent=39 // pred_fallthru
          _
        // Predicated region
        $region135: #{tpu_custom_call.1} parent=39 // pred_check
          _
        $region136: #{tpu_custom_call.1} parent=39 // pred_check_branch
          %420 = sbr.rel (0) target = $region138
        $region137: #{tpu_custom_call.1} parent=39 // pred_region
          %s422 = ssub.s32 2, 1
          loop: start=0, step=1, limit=1
          $region139: #{tpu_custom_call.1} parent=137 // loop_pre_header
            _
          $region140: #{tpu_custom_call.1} parent=137 // loop_header
            %s424 = sphi 0, %s428
            %p425 = scmp.ge.s32.totalorder %s424, 1
            %s429 = sphi %s415, %s415
            %s430 = sphi %s416, %s416
          $region141: #{tpu_custom_call.1} parent=137 // loop_header_branch
            %427 = sbr.rel (%p425) target = $region145
          $region142: #{tpu_custom_call.1} parent=137 // loop_body
            %v431 = vld [vmem:[%s429] sm:%s422]
            %432 = vst [vmem:[%s430] sm:%s422] %v431
          $region143: #{tpu_custom_call.1} parent=137 // loop_footer
            %s428 = sadd.s32 1, %s424
          $region144: #{tpu_custom_call.1} parent=137 // loop_footer_branch
            %423 = sbr.rel target = $region140
          $region145: #{tpu_custom_call.1} parent=137 // loop_exit
            _
        $region138: #{tpu_custom_call.1} parent=39 // pred_fallthru
          _
        // Predicated region
        $region157: #{tpu_custom_call.1} parent=39 // pred_check
          _
        $region158: #{tpu_custom_call.1} parent=39 // pred_check_branch
          %449 = sbr.rel (0) target = $region160
        $region159: #{tpu_custom_call.1} parent=39 // pred_region
          %450 = vsyncadd [#allocation3], 16
        $region160: #{tpu_custom_call.1} parent=39 // pred_fallthru
          _
        %s451 = sadd.s32 %s272, 4
        %s452 = sshra.s32 %s451, 7
        %s453 = sand.u32 %s451, 127
        %s454 = sadd.s32 %s452, %s34
        %s455 = smul.u32 %s454, 128
        %s456 = sshra.s32 %s451, 7
        %s457 = sand.u32 %s451, 127
        %s458 = sadd.s32 %s455, %s457
        %s459 = sld [smem:[#allocation5 + %s458]]
        %s460 = scalar_lea.vmem %s2, %s459
        %s461 = scalar_lea.vmem [#allocation2], 4
        // Predicated region
        $region161: #{tpu_custom_call.1} parent=39 // pred_check
          _
        $region162: #{tpu_custom_call.1} parent=39 // pred_check_branch
          %463 = sbr.rel target = $region164
        $region163: #{tpu_custom_call.1} parent=39 // pred_region
          // Predicated region
          $region176: #{tpu_custom_call.1} parent=163 // pred_check
            _
          $region177: #{tpu_custom_call.1} parent=163 // pred_check_branch
            %479 = sbr.rel (0) target = $region179
          $region178: #{tpu_custom_call.1} parent=163 // pred_region
            %s481 = ssub.s32 2, 1
            loop: start=0, step=1, limit=1
            $region180: #{tpu_custom_call.1} parent=178 // loop_pre_header
              _
            $region181: #{tpu_custom_call.1} parent=178 // loop_header
              %s483 = sphi 0, %s487
              %p484 = scmp.ge.s32.totalorder %s483, 1
              %s488 = sphi %s460, %s460
              %s489 = sphi %s461, %s461
            $region182: #{tpu_custom_call.1} parent=178 // loop_header_branch
              %486 = sbr.rel (%p484) target = $region186
            $region183: #{tpu_custom_call.1} parent=178 // loop_body
              %v490 = vld [vmem:[%s488] sm:%s481]
              %491 = vst [vmem:[%s489] sm:%s481] %v490
            $region184: #{tpu_custom_call.1} parent=178 // loop_footer
              %s487 = sadd.s32 1, %s483
            $region185: #{tpu_custom_call.1} parent=178 // loop_footer_branch
              %482 = sbr.rel target = $region181
            $region186: #{tpu_custom_call.1} parent=178 // loop_exit
              _
          $region179: #{tpu_custom_call.1} parent=163 // pred_fallthru
            _
        $region164: #{tpu_custom_call.1} parent=39 // pred_fallthru
          _
        // Predicated region
        $region165: #{tpu_custom_call.1} parent=39 // pred_check
          _
        $region166: #{tpu_custom_call.1} parent=39 // pred_check_branch
          %465 = sbr.rel (0) target = $region168
        $region167: #{tpu_custom_call.1} parent=39 // pred_region
          %s467 = ssub.s32 2, 1
          loop: start=0, step=1, limit=1
          $region169: #{tpu_custom_call.1} parent=167 // loop_pre_header
            _
          $region170: #{tpu_custom_call.1} parent=167 // loop_header
            %s469 = sphi 0, %s473
            %p470 = scmp.ge.s32.totalorder %s469, 1
            %s474 = sphi %s460, %s460
            %s475 = sphi %s461, %s461
          $region171: #{tpu_custom_call.1} parent=167 // loop_header_branch
            %472 = sbr.rel (%p470) target = $region175
          $region172: #{tpu_custom_call.1} parent=167 // loop_body
            %v476 = vld [vmem:[%s474] sm:%s467]
            %477 = vst [vmem:[%s475] sm:%s467] %v476
          $region173: #{tpu_custom_call.1} parent=167 // loop_footer
            %s473 = sadd.s32 1, %s469
          $region174: #{tpu_custom_call.1} parent=167 // loop_footer_branch
            %468 = sbr.rel target = $region170
          $region175: #{tpu_custom_call.1} parent=167 // loop_exit
            _
        $region168: #{tpu_custom_call.1} parent=39 // pred_fallthru
          _
        // Predicated region
        $region187: #{tpu_custom_call.1} parent=39 // pred_check
          _
        $region188: #{tpu_custom_call.1} parent=39 // pred_check_branch
          %494 = sbr.rel (0) target = $region190
        $region189: #{tpu_custom_call.1} parent=39 // pred_region
          %495 = vsyncadd [#allocation3], 16
        $region190: #{tpu_custom_call.1} parent=39 // pred_fallthru
          _
        %s496 = sadd.s32 %s272, 5
        %s497 = sshra.s32 %s496, 7
        %s498 = sand.u32 %s496, 127
        %s499 = sadd.s32 %s497, %s34
        %s500 = smul.u32 %s499, 128
        %s501 = sshra.s32 %s496, 7
        %s502 = sand.u32 %s496, 127
        %s503 = sadd.s32 %s500, %s502
        %s504 = sld [smem:[#allocation5 + %s503]]
        %s505 = scalar_lea.vmem %s2, %s504
        %s506 = scalar_lea.vmem [#allocation2], 5
        // Predicated region
        $region191: #{tpu_custom_call.1} parent=39 // pred_check
          _
        $region192: #{tpu_custom_call.1} parent=39 // pred_check_branch
          %508 = sbr.rel target = $region194
        $region193: #{tpu_custom_call.1} parent=39 // pred_region
          // Predicated region
          $region206: #{tpu_custom_call.1} parent=193 // pred_check
            _
          $region207: #{tpu_custom_call.1} parent=193 // pred_check_branch
            %524 = sbr.rel (0) target = $region209
          $region208: #{tpu_custom_call.1} parent=193 // pred_region
            %s526 = ssub.s32 2, 1
            loop: start=0, step=1, limit=1
            $region210: #{tpu_custom_call.1} parent=208 // loop_pre_header
              _
            $region211: #{tpu_custom_call.1} parent=208 // loop_header
              %s528 = sphi 0, %s532
              %p529 = scmp.ge.s32.totalorder %s528, 1
              %s533 = sphi %s505, %s505
              %s534 = sphi %s506, %s506
            $region212: #{tpu_custom_call.1} parent=208 // loop_header_branch
              %531 = sbr.rel (%p529) target = $region216
            $region213: #{tpu_custom_call.1} parent=208 // loop_body
              %v535 = vld [vmem:[%s533] sm:%s526]
              %536 = vst [vmem:[%s534] sm:%s526] %v535
            $region214: #{tpu_custom_call.1} parent=208 // loop_footer
              %s532 = sadd.s32 1, %s528
            $region215: #{tpu_custom_call.1} parent=208 // loop_footer_branch
              %527 = sbr.rel target = $region211
            $region216: #{tpu_custom_call.1} parent=208 // loop_exit
              _
          $region209: #{tpu_custom_call.1} parent=193 // pred_fallthru
            _
        $region194: #{tpu_custom_call.1} parent=39 // pred_fallthru
          _
        // Predicated region
        $region195: #{tpu_custom_call.1} parent=39 // pred_check
          _
        $region196: #{tpu_custom_call.1} parent=39 // pred_check_branch
          %510 = sbr.rel (0) target = $region198
        $region197: #{tpu_custom_call.1} parent=39 // pred_region
          %s512 = ssub.s32 2, 1
          loop: start=0, step=1, limit=1
          $region199: #{tpu_custom_call.1} parent=197 // loop_pre_header
            _
          $region200: #{tpu_custom_call.1} parent=197 // loop_header
            %s514 = sphi 0, %s518
            %p515 = scmp.ge.s32.totalorder %s514, 1
            %s519 = sphi %s505, %s505
            %s520 = sphi %s506, %s506
          $region201: #{tpu_custom_call.1} parent=197 // loop_header_branch
            %517 = sbr.rel (%p515) target = $region205
          $region202: #{tpu_custom_call.1} parent=197 // loop_body
            %v521 = vld [vmem:[%s519] sm:%s512]
            %522 = vst [vmem:[%s520] sm:%s512] %v521
          $region203: #{tpu_custom_call.1} parent=197 // loop_footer
            %s518 = sadd.s32 1, %s514
          $region204: #{tpu_custom_call.1} parent=197 // loop_footer_branch
            %513 = sbr.rel target = $region200
          $region205: #{tpu_custom_call.1} parent=197 // loop_exit
            _
        $region198: #{tpu_custom_call.1} parent=39 // pred_fallthru
          _
        // Predicated region
        $region217: #{tpu_custom_call.1} parent=39 // pred_check
          _
        $region218: #{tpu_custom_call.1} parent=39 // pred_check_branch
          %539 = sbr.rel (0) target = $region220
        $region219: #{tpu_custom_call.1} parent=39 // pred_region
          %540 = vsyncadd [#allocation3], 16
        $region220: #{tpu_custom_call.1} parent=39 // pred_fallthru
          _
        %s541 = sadd.s32 %s272, 6
        %s542 = sshra.s32 %s541, 7
        %s543 = sand.u32 %s541, 127
        %s544 = sadd.s32 %s542, %s34
        %s545 = smul.u32 %s544, 128
        %s546 = sshra.s32 %s541, 7
        %s547 = sand.u32 %s541, 127
        %s548 = sadd.s32 %s545, %s547
        %s549 = sld [smem:[#allocation5 + %s548]]
        %s550 = scalar_lea.vmem %s2, %s549
        %s551 = scalar_lea.vmem [#allocation2], 6
        // Predicated region
        $region221: #{tpu_custom_call.1} parent=39 // pred_check
          _
        $region222: #{tpu_custom_call.1} parent=39 // pred_check_branch
          %553 = sbr.rel target = $region224
        $region223: #{tpu_custom_call.1} parent=39 // pred_region
          // Predicated region
          $region236: #{tpu_custom_call.1} parent=223 // pred_check
            _
          $region237: #{tpu_custom_call.1} parent=223 // pred_check_branch
            %569 = sbr.rel (0) target = $region239
          $region238: #{tpu_custom_call.1} parent=223 // pred_region
            %s571 = ssub.s32 2, 1
            loop: start=0, step=1, limit=1
            $region240: #{tpu_custom_call.1} parent=238 // loop_pre_header
              _
            $region241: #{tpu_custom_call.1} parent=238 // loop_header
              %s573 = sphi 0, %s577
              %p574 = scmp.ge.s32.totalorder %s573, 1
              %s578 = sphi %s550, %s550
              %s579 = sphi %s551, %s551
            $region242: #{tpu_custom_call.1} parent=238 // loop_header_branch
              %576 = sbr.rel (%p574) target = $region246
            $region243: #{tpu_custom_call.1} parent=238 // loop_body
              %v580 = vld [vmem:[%s578] sm:%s571]
              %581 = vst [vmem:[%s579] sm:%s571] %v580
            $region244: #{tpu_custom_call.1} parent=238 // loop_footer
              %s577 = sadd.s32 1, %s573
            $region245: #{tpu_custom_call.1} parent=238 // loop_footer_branch
              %572 = sbr.rel target = $region241
            $region246: #{tpu_custom_call.1} parent=238 // loop_exit
              _
          $region239: #{tpu_custom_call.1} parent=223 // pred_fallthru
            _
        $region224: #{tpu_custom_call.1} parent=39 // pred_fallthru
          _
        // Predicated region
        $region225: #{tpu_custom_call.1} parent=39 // pred_check
          _
        $region226: #{tpu_custom_call.1} parent=39 // pred_check_branch
          %555 = sbr.rel (0) target = $region228
        $region227: #{tpu_custom_call.1} parent=39 // pred_region
          %s557 = ssub.s32 2, 1
          loop: start=0, step=1, limit=1
          $region229: #{tpu_custom_call.1} parent=227 // loop_pre_header
            _
          $region230: #{tpu_custom_call.1} parent=227 // loop_header
            %s559 = sphi 0, %s563
            %p560 = scmp.ge.s32.totalorder %s559, 1
            %s564 = sphi %s550, %s550
            %s565 = sphi %s551, %s551
          $region231: #{tpu_custom_call.1} parent=227 // loop_header_branch
            %562 = sbr.rel (%p560) target = $region235
          $region232: #{tpu_custom_call.1} parent=227 // loop_body
            %v566 = vld [vmem:[%s564] sm:%s557]
            %567 = vst [vmem:[%s565] sm:%s557] %v566
          $region233: #{tpu_custom_call.1} parent=227 // loop_footer
            %s563 = sadd.s32 1, %s559
          $region234: #{tpu_custom_call.1} parent=227 // loop_footer_branch
            %558 = sbr.rel target = $region230
          $region235: #{tpu_custom_call.1} parent=227 // loop_exit
            _
        $region228: #{tpu_custom_call.1} parent=39 // pred_fallthru
          _
        // Predicated region
        $region247: #{tpu_custom_call.1} parent=39 // pred_check
          _
        $region248: #{tpu_custom_call.1} parent=39 // pred_check_branch
          %584 = sbr.rel (0) target = $region250
        $region249: #{tpu_custom_call.1} parent=39 // pred_region
          %585 = vsyncadd [#allocation3], 16
        $region250: #{tpu_custom_call.1} parent=39 // pred_fallthru
          _
        %s586 = sadd.s32 %s272, 7
        %s587 = sshra.s32 %s586, 7
        %s588 = sand.u32 %s586, 127
        %s589 = sadd.s32 %s587, %s34
        %s590 = smul.u32 %s589, 128
        %s591 = sshra.s32 %s586, 7
        %s592 = sand.u32 %s586, 127
        %s593 = sadd.s32 %s590, %s592
        %s594 = sld [smem:[#allocation5 + %s593]]
        %s595 = scalar_lea.vmem %s2, %s594
        %s596 = scalar_lea.vmem [#allocation2], 7
        // Predicated region
        $region251: #{tpu_custom_call.1} parent=39 // pred_check
          _
        $region252: #{tpu_custom_call.1} parent=39 // pred_check_branch
          %598 = sbr.rel target = $region254
        $region253: #{tpu_custom_call.1} parent=39 // pred_region
          // Predicated region
          $region266: #{tpu_custom_call.1} parent=253 // pred_check
            _
          $region267: #{tpu_custom_call.1} parent=253 // pred_check_branch
            %614 = sbr.rel (0) target = $region269
          $region268: #{tpu_custom_call.1} parent=253 // pred_region
            %s616 = ssub.s32 2, 1
            loop: start=0, step=1, limit=1
            $region270: #{tpu_custom_call.1} parent=268 // loop_pre_header
              _
            $region271: #{tpu_custom_call.1} parent=268 // loop_header
              %s618 = sphi 0, %s622
              %p619 = scmp.ge.s32.totalorder %s618, 1
              %s623 = sphi %s595, %s595
              %s624 = sphi %s596, %s596
            $region272: #{tpu_custom_call.1} parent=268 // loop_header_branch
              %621 = sbr.rel (%p619) target = $region276
            $region273: #{tpu_custom_call.1} parent=268 // loop_body
              %v625 = vld [vmem:[%s623] sm:%s616]
              %626 = vst [vmem:[%s624] sm:%s616] %v625
            $region274: #{tpu_custom_call.1} parent=268 // loop_footer
              %s622 = sadd.s32 1, %s618
            $region275: #{tpu_custom_call.1} parent=268 // loop_footer_branch
              %617 = sbr.rel target = $region271
            $region276: #{tpu_custom_call.1} parent=268 // loop_exit
              _
          $region269: #{tpu_custom_call.1} parent=253 // pred_fallthru
            _
        $region254: #{tpu_custom_call.1} parent=39 // pred_fallthru
          _
        // Predicated region
        $region255: #{tpu_custom_call.1} parent=39 // pred_check
          _
        $region256: #{tpu_custom_call.1} parent=39 // pred_check_branch
          %600 = sbr.rel (0) target = $region258
        $region257: #{tpu_custom_call.1} parent=39 // pred_region
          %s602 = ssub.s32 2, 1
          loop: start=0, step=1, limit=1
          $region259: #{tpu_custom_call.1} parent=257 // loop_pre_header
            _
          $region260: #{tpu_custom_call.1} parent=257 // loop_header
            %s604 = sphi 0, %s608
            %p605 = scmp.ge.s32.totalorder %s604, 1
            %s609 = sphi %s595, %s595
            %s610 = sphi %s596, %s596
          $region261: #{tpu_custom_call.1} parent=257 // loop_header_branch
            %607 = sbr.rel (%p605) target = $region265
          $region262: #{tpu_custom_call.1} parent=257 // loop_body
            %v611 = vld [vmem:[%s609] sm:%s602]
            %612 = vst [vmem:[%s610] sm:%s602] %v611
          $region263: #{tpu_custom_call.1} parent=257 // loop_footer
            %s608 = sadd.s32 1, %s604
          $region264: #{tpu_custom_call.1} parent=257 // loop_footer_branch
            %603 = sbr.rel target = $region260
          $region265: #{tpu_custom_call.1} parent=257 // loop_exit
            _
        $region258: #{tpu_custom_call.1} parent=39 // pred_fallthru
          _
        // Predicated region
        $region277: #{tpu_custom_call.1} parent=39 // pred_check
          _
        $region278: #{tpu_custom_call.1} parent=39 // pred_check_branch
          %629 = sbr.rel (0) target = $region280
        $region279: #{tpu_custom_call.1} parent=39 // pred_region
          %630 = vsyncadd [#allocation3], 16
        $region280: #{tpu_custom_call.1} parent=39 // pred_fallthru
          _
        %v631 = vld [vmem:[%s5] sm:$0x1]
        %v632 = vld [vmem:[%s6] sm:$0x1]
        %v633 = vld [vmem:[%s4] sm:$0x1]
        %v634 = vld [vmem:[%s4 + $0x1] sm:$0x1]
        %v635 = vsub.f32 %v634, %v633
        %s636 = smul.u32 8, 1
        %s637 = sshll.u32 %s636, 4
        %638 = dma.done [#allocation3], %s637
        %v639 = vld [vmem:[#allocation2] sm:$0xff]
        %v640 = vld [vmem:[%s271] sm:$0xff]
        %v641 = vld [vmem:[%s267] sm:$0xff]
        %vm642 = vcmp.eq.s32.totalorder %v641, 1
        %v643 = vsel %vm642, 1, 0
        %v644 = vcvt.s32.f32 %v643
        %646 = vset.pattern.permute.xlu0 0
        %647 = vperm.xlu0 %646, %v644
        %v648 = vpop.permute.xlu0 %647
        %v650 = vperm.slane %v635, 0
        %v651 = vmul.f32 %v648, %v650
        %v652 = vperm.slane %v633, 0
        %v653 = vadd.f32 %v652, %v651
        %v654 = vadd.f32 %v639, %v640
        %v655 = vadd.f32 %v654, %v653
        %vm656 = vcmask 261120
        %v657 = vsel %vm656, %v655, 0.0
        %658 = vadd.xlane.f32.xlu0 %v657
        %v659 = vpop.xlane.xlu0 %658
        %v660 = vrcp.pop 32.0
        %v661 = vmul.f32 32.0, %v660
        %v662 = vsub.f32 1.0, %v661
        %v663 = vmul.f32 %v660, %v662
        %v664 = vadd.f32 %v660, %v663
        %vm665 = vweird.f32 %v660
        %v666 = vsel %vm665, %v660, %v664
        %v667 = vmul.f32 %v659, %v666
        %v668 = vsub.f32 %v655, %v667
        %v669 = vmul.f32 %v668, %v668
        %v670 = vsel %vm656, %v669, 0.0
        %671 = vadd.xlane.f32.xlu0 %v670
        %v672 = vpop.xlane.xlu0 %671
        %v673 = vmul.f32 %v672, %v666
        %v674 = vadd.f32 %v673, 1e-05
        %v675 = vrsqrt.pop %v674
        %v676 = vmul.f32 %v675, %v674
        %v677 = vmul.f32 %v676, %v675
        %v678 = vmul.f32 0.5, %v677
        %v679 = vsub.f32 1.5, %v678
        %v680 = vmul.f32 %v675, %v679
        %vm681 = vweird.f32 %v674
        %vm682 = vweird.f32 %v675
        %vm683 = vmor %vm681, %vm682
        %v684 = vsel %vm683, %v675, %v680
        %v685 = vmul.f32 %v668, %v684
        %v687 = vperm.slane %v631, 0
        %v689 = vmul.f32 %v685, %v687
        %v691 = vperm.slane %v632, 0
        %v693 = vadd.f32 %v689, %v691
        %694 = vst.msk [vmem:[%s260] sm:$0xff] %vm656, %v693
        %s695 = sand.u32 %s168, 1
        %s696 = scalar_lea.sflag [#allocation7], %s695
        %s697 = sand.u32 %s168, 1
        %s698 = smul.addr %s697, 8
        %s699 = scalar_lea.vmem [#allocation6], %s698
        // Predicated region
        $region281: #{tpu_custom_call.1} parent=39 // pred_check
          %p700 = pneg %p178
        $region282: #{tpu_custom_call.1} parent=39 // pred_check_branch
          %702 = sbr.rel (%p700) target = $region284
        $region283: #{tpu_custom_call.1} parent=39 // pred_region
          %704 = vsyncadd %s696, 0
          %s705 = sadd.s32 %s33, %s34
          %s706 = smul.addr %s705, 8
          %s707 = scalar_lea.hbm %s7, %s706
          %s709 = sshll.u32 %s699, 4
          %s710 = int_to_ptr.vmem [resolvable:$true] %s709
          %s711 = sshll.u32 %s707, 4
          %s712 = int_to_ptr.hbm [resolvable:$true] %s711
          %714 = dma.vmem_to_hbm [thread:$0]  %s710, 128, %s712, %s696
        $region284: #{tpu_custom_call.1} parent=39 // pred_fallthru
          _
      $region40: #{tpu_custom_call.1} parent=5 // pred_fallthru
        _
      %p715 = scmp.le.s32.totalorder 2, %s24
      // Predicated region
      $region285: #{tpu_custom_call.1} parent=5 // pred_check
        %p716 = pneg %p715
      $region286: #{tpu_custom_call.1} parent=5 // pred_check_branch
        %718 = sbr.rel (%p716) target = $region288
      $region287: #{tpu_custom_call.1} parent=5 // pred_region
        %s719 = ssub.s32 %s24, 2
        // Predicated region
        $region289: #{tpu_custom_call.1} parent=287 // pred_check
          %p720 = pneg %p184
        $region290: #{tpu_custom_call.1} parent=287 // pred_check_branch
          %722 = sbr.rel (%p720) target = $region292
        $region291: #{tpu_custom_call.1} parent=287 // pred_region
          %s723 = sand.u32 %s169, 1
          %s724 = scalar_lea.sflag [#allocation7], %s723
          %s725 = sand.u32 %s169, 1
          %s726 = smul.addr %s725, 8
          %s727 = scalar_lea.vmem [#allocation6], %s726
          %729 = dma.done %s724, 128
        $region292: #{tpu_custom_call.1} parent=287 // pred_fallthru
          _
      $region288: #{tpu_custom_call.1} parent=5 // pred_fallthru
        _
    $region6: #{tpu_custom_call.1} parent=1 // loop_footer
      %s28 = sadd.s32 1, %s24
    $region7: #{tpu_custom_call.1} parent=1 // loop_footer_branch
      %23 = sbr.rel target = $region3
    $region8: #{tpu_custom_call.1} parent=1 // loop_exit
      _
    %730 = vsyncpa [#allocation7], 1
    %s731 = scalar_lea.sflag [#allocation7], 1
    %732 = vsyncpa %s731, 1
  %733 = vsyncmov [#allocation3]
  %s734 = vpop.sfrf %733
  %p735 = scmp.eq.s32.totalorder %s734, 0
  %p736 = pneg %p735
  %738 = shalt.err (%p736)

</llo_original>
